<compile_context>
chip_gen: v5e
topology: v5e:2x2
jax: 0.10.0
libtpu: 0.0.40
codegen_flags: <defaults>
</compile_context>

<pallas_src>
from functools import partial

import jax
import jax.numpy as jnp
import numpy as np
from jax.experimental import pallas as pl
from jax.experimental.pallas import tpu as pltpu


def _round_up(a, m):
    return ((a + m - 1) // m) * m


def _length_regulator_kernel(mel_len_ref, clo_ref, chi_ref, x_ref, idx_ref,
                             o_ref, *, ct):
    """One (batch, L-tile) grid step.

    mel_len_ref: (B,)          SMEM int32  total expanded length per batch
    clo_ref:     (B, n_k)      SMEM int32  first output frame of token-chunk k
    chi_ref:     (B, n_k)      SMEM int32  one-past-last output frame of chunk k
    x_ref:       (1, T_pad, Hp) VMEM       token vectors (native dtype)
    idx_ref:     (1, TL, 1)    VMEM int32  frame -> token index for this tile
    o_ref:       (1, TL, Hp)   VMEM        one output tile of expanded frames
    """
    b = pl.program_id(0)
    l = pl.program_id(1)
    tl = o_ref.shape[1]
    t_pad = x_ref.shape[1]
    n_k = t_pad // ct
    tile_start = l * tl
    tile_end = tile_start + tl

    @pl.when(tile_start < mel_len_ref[b])
    def _compute():
        o_ref[...] = jnp.zeros_like(o_ref)
        idx = idx_ref[0]  # (TL, 1) int32, frame -> token

        # Banded gather: only token chunks whose frame span intersects this
        # output tile contribute; all others are skipped (scalar test in SMEM).
        for k in range(n_k):  # static unroll over token chunks
            @pl.when(jnp.logical_and(chi_ref[b, k] > tile_start,
                                     clo_ref[b, k] < tile_end))
            def _chunk(k=k):
                tok = k * ct + jax.lax.broadcasted_iota(jnp.int32, (tl, ct), 1)
                mask = idx == tok  # (TL, ct), one-hot (or all-zero) per row
                # One-hot matmul -> exact row copy; native dtype operands so
                # bf16 inputs use the fast MXU path.
                part = jnp.dot(mask.astype(x_ref.dtype),
                               x_ref[0, pl.ds(k * ct, ct), :],
                               preferred_element_type=jnp.float32)
                # Each output row gets at most one nonzero contribution across
                # all chunks, so accumulating in the output dtype is exact.
                o_ref[0] += part.astype(o_ref.dtype)

    @pl.when(tile_start >= mel_len_ref[b])
    def _pad():
        # Whole tile lies past the expanded length: pure zero padding.
        o_ref[...] = jnp.zeros_like(o_ref)


def length_regulator(x, duration, max_len, *, tile_l=512):
    """x: [B, T, H], duration: [B, T] int -> ([B, max_len, H], mel_len [B] int32).

    mel_len is the sum of clamped durations (may exceed max_len, matching the
    PyTorch module); it is int32 here instead of torch's int64 LongTensor.
    """
    # TODO(synk): max_len=None (pad to the batch max like the torch module)
    # needs a host-known length; pass an explicit int max_len instead.
    B, T, H = x.shape

    # ---- Cheap prologue in XLA (computed once, fused, outside the kernel) ----
    dur = jnp.maximum(duration.astype(jnp.int32), 0)   # clamp like max(int, 0)
    cs = jnp.cumsum(dur, axis=-1)                       # inclusive cumsum (B, T)
    mel_len = cs[:, -1]                                 # (B,) int32

    # Token-axis chunking (band width of the in-kernel gather matmul).
    ct = 128 if T > 128 else max(8, _round_up(T, 8))
    n_k = pl.cdiv(T, ct)
    t_pad = n_k * ct

    # L tiling: big tiles to amortize the ~0.35us per-step overhead; force at
    # least 2 tiles when B < 2 so megacore has a parallel axis.
    if max_len > tile_l:
        tl = tile_l
    else:
        tl = max(8, _round_up(max_len, 8))
    n_l = pl.cdiv(max_len, tl)
    if B < 2 and n_l < 2 and tl > 8:
        tl = max(8, _round_up(pl.cdiv(max_len, 2), 8))
        n_l = pl.cdiv(max_len, tl)
    l_pad = n_l * tl

    # Lane-dense hidden dim.
    hp = _round_up(H, 128)

    # Pad tokens / hidden once in the wrapper.
    x_p = x
    if t_pad != T or hp != H:
        x_p = jnp.pad(x, ((0, 0), (0, t_pad - T), (0, hp - H)))
    dur_p = jnp.pad(dur, ((0, 0), (0, t_pad - T))) if t_pad != T else dur
    cs_p = jnp.cumsum(dur_p, axis=-1)
    csp_p = cs_p - dur_p
    chunk_lo = csp_p[:, ::ct].astype(jnp.int32)         # (B, n_k)
    chunk_hi = cs_p[:, ct - 1::ct].astype(jnp.int32)    # (B, n_k)

    # Frame -> token map (single equality compare in the kernel instead of the
    # old two-sided cs/csp range test).  Frames past mel_len map to T, which
    # either hits a zero-padded token row or falls outside every chunk -> 0.
    frames = jnp.arange(l_pad, dtype=jnp.int32)
    idx = jax.vmap(lambda c: jnp.searchsorted(c, frames, side='right'))(cs)
    idx3 = idx.astype(jnp.int32).reshape(B, l_pad, 1)

    # Explicit VMEM budget (v7x: 64 MiB physical / 32 MiB scoped default).
    itemsize = x.dtype.itemsize
    need = (2 * t_pad * hp * itemsize        # double-buffered x block
            + 2 * tl * hp * itemsize         # double-buffered output tile
            + 2 * tl * 128 * 4)              # double-buffered idx tile (lane-padded)
    vmem_limit = int(min(64 * 1024 * 1024,
                         max(2 * need + (4 << 20), 32 * 1024 * 1024)))

    out = pl.pallas_call(
        partial(_length_regulator_kernel, ct=ct),
        out_shape=jax.ShapeDtypeStruct((B, l_pad, hp), x.dtype),
        grid_spec=pltpu.PrefetchScalarGridSpec(
            num_scalar_prefetch=3,
            grid=(B, n_l),
            in_specs=[
                pl.BlockSpec((1, t_pad, hp), lambda b, l, ml, lo, hi: (b, 0, 0)),
                pl.BlockSpec((1, tl, 1), lambda b, l, ml, lo, hi: (b, l, 0)),
            ],
            out_specs=pl.BlockSpec((1, tl, hp), lambda b, l, ml, lo, hi: (b, l, 0)),
        ),
        compiler_params=pltpu.CompilerParams(
            dimension_semantics=("parallel", "parallel"),
            vmem_limit_bytes=vmem_limit),
    )(mel_len, chunk_lo, chunk_hi, x_p, idx3)

    if l_pad != max_len or hp != H:
        out = out[:, :max_len, :H]
    return out, mel_len


def _reference(x, duration, max_len):
    """Pure numpy re-implementation of the PyTorch forward, for checking."""
    x = np.asarray(x)
    duration = np.asarray(duration)
    B, T, H = x.shape
    out = np.zeros((B, max_len, H), dtype=x.dtype)
    mel_len = np.zeros((B,), dtype=np.int32)
    for b in range(B):
        rows = []
        for i in range(T):
            rep = max(int(duration[b, i]), 0)
            rows.append(np.repeat(x[b, i][None, :], rep, axis=0))
        expanded = np.concatenate(rows, axis=0) if rows else np.zeros((0, H), x.dtype)
        mel_len[b] = expanded.shape[0]
        n = min(expanded.shape[0], max_len)
        out[b, :n] = expanded[:n]
    return out, mel_len


if __name__ == "__main__":
    B, T, H = 2, 8, 32
    MAX_LEN = 32

    key = jax.random.PRNGKey(0)
    kx, kd = jax.random.split(key)
    x = jax.random.normal(kx, (B, T, H), dtype=jnp.float32)
    duration = jax.random.randint(kd, (B, T), 0, 5, dtype=jnp.int32)  # sums <= 32

    out, mel_len = length_regulator(x, duration, MAX_LEN)
    out = jax.block_until_ready(out)
    mel_len = jax.block_until_ready(mel_len)

    ref_out, ref_mel = _reference(x, duration, MAX_LEN)
    np.testing.assert_allclose(np.asarray(out), ref_out, rtol=1e-5, atol=1e-5)
    np.testing.assert_array_equal(np.asarray(mel_len), ref_mel)

    print("KERNEL_OK")
</pallas_src>

<mosaic_0001>
module attributes {stable_mosaic.version = 11 : i64} {
  func.func @_length_regulator_kernel(%arg0: i32, %arg1: i32, %arg2: memref<2xi32, #tpu.memory_space<smem>>, %arg3: memref<2x1xi32, #tpu.memory_space<smem>>, %arg4: memref<2x1xi32, #tpu.memory_space<smem>>, %arg5: memref<1x8x128xf32, #tpu.memory_space<vmem>>, %arg6: memref<1x32x1xi32, #tpu.memory_space<vmem>>, %arg7: memref<1x32x128xf32, #tpu.memory_space<vmem>>) attributes {dimension_semantics = [#tpu.dimension_semantics<parallel>, #tpu.dimension_semantics<parallel>], iteration_bounds = array<i64: 2, 1>, scalar_prefetch = 3 : i64, scratch_operands = 0 : i64, tpu.core_type = #tpu.core_type<tc>, window_params = [{transform_indices = @transform_0, window_bounds = array<i64: 1, 8, 128>}, {transform_indices = @transform_1, window_bounds = array<i64: 1, 32, 1>}, {transform_indices = @transform_2, window_bounds = array<i64: 1, 32, 128>}]} {
    %c32_i32 = arith.constant 32 : i32
    %0 = arith.muli %arg1, %c32_i32 : i32
    %c32_i32_0 = arith.constant 32 : i32
    %1 = arith.addi %0, %c32_i32_0 : i32
    %2 = arith.index_cast %arg0 : i32 to index
    %3 = memref.load %arg2[%2] : memref<2xi32, #tpu.memory_space<smem>>
    %4 = arith.cmpi slt, %0, %3 : i32
    %5 = arith.extui %4 : i1 to i32
    %c0_i32 = arith.constant 0 : i32
    %6 = arith.cmpi ne, %5, %c0_i32 : i32
    scf.if %6 {
      %cst = arith.constant 0.000000e+00 : f32
      %12 = vector.broadcast %cst : f32 to vector<1x32x128xf32>
      %c0 = arith.constant 0 : index
      %c0_2 = arith.constant 0 : index
      %c0_3 = arith.constant 0 : index
      %13 = vector.load %arg7[%c0, %c0_2, %c0_3] : memref<1x32x128xf32, #tpu.memory_space<vmem>>, vector<1x32x128xf32>
      tpu.vector_store %arg7[%c0, %c0_2, %c0_3], %12 {strides = array<i32>} : memref<1x32x128xf32, #tpu.memory_space<vmem>>, vector<1x32x128xf32>,
      %c0_4 = arith.constant 0 : index
      %c0_5 = arith.constant 0 : index
      %c0_6 = arith.constant 0 : index
      %14 = vector.load %arg6[%c0_4, %c0_5, %c0_6] : memref<1x32x1xi32, #tpu.memory_space<vmem>>, vector<1x32x1xi32>
      %15 = vector.shape_cast %14 : vector<1x32x1xi32> to vector<32x1xi32>
      %16 = arith.index_cast %arg0 : i32 to index
      %c0_7 = arith.constant 0 : index
      %17 = memref.load %arg4[%16, %c0_7] : memref<2x1xi32, #tpu.memory_space<smem>>
      %18 = arith.cmpi sgt, %17, %0 : i32
      %19 = arith.index_cast %arg0 : i32 to index
      %c0_8 = arith.constant 0 : index
      %20 = memref.load %arg3[%19, %c0_8] : memref<2x1xi32, #tpu.memory_space<smem>>
      %21 = arith.cmpi slt, %20, %1 : i32
      %22 = arith.andi %18, %21 : i1
      %23 = arith.extui %22 : i1 to i32
      %c0_i32_9 = arith.constant 0 : i32
      %24 = arith.cmpi ne, %23, %c0_i32_9 : i32
      scf.if %24 {
        %25 = tpu.iota {dimensions = array<i32: 1>} : vector<32x8xi32>
        %c0_i32_10 = arith.constant 0 : i32
        %26 = vector.broadcast %c0_i32_10 : i32 to vector<32x8xi32>
        %27 = arith.addi %26, %25 : vector<32x8xi32>
        %28 = vector.broadcast %15 : vector<32x1xi32> to vector<32x8xi32>
        %29 = arith.cmpi eq, %28, %27 : vector<32x8xi32>
        %30 = arith.extui %29 : vector<32x8xi1> to vector<32x8xi32>
        %31 = arith.sitofp %30 : vector<32x8xi32> to vector<32x8xf32>
        %c0_11 = arith.constant 0 : index
        %c0_12 = arith.constant 0 : index
        %c0_13 = arith.constant 0 : index
        %32 = vector.load %arg5[%c0_11, %c0_12, %c0_13] : memref<1x8x128xf32, #tpu.memory_space<vmem>>, vector<1x8x128xf32>
        %33 = vector.shape_cast %32 : vector<1x8x128xf32> to vector<8x128xf32>
        %cst_14 = arith.constant dense<0.000000e+00> : vector<32x128xf32>
        %34 = tpu.matmul %31, %33, %cst_14 {dimension_numbers = #tpu.dot_dimension_numbers<[1], [0], [0], [1], [0, 0, 1, 1], [], []>} : vector<32x8xf32>, vector<8x128xf32>, vector<32x128xf32> -> vector<32x128xf32>
        %c0_15 = arith.constant 0 : index
        %c0_16 = arith.constant 0 : index
        %c0_17 = arith.constant 0 : index
        %35 = vector.load %arg7[%c0_15, %c0_16, %c0_17] : memref<1x32x128xf32, #tpu.memory_space<vmem>>, vector<1x32x128xf32>
        %36 = vector.shape_cast %35 : vector<1x32x128xf32> to vector<32x128xf32>
        %37 = arith.addf %36, %34 : vector<32x128xf32>
        %c0_18 = arith.constant 0 : index
        %c0_19 = arith.constant 0 : index
        %c0_20 = arith.constant 0 : index
        %38 = vector.load %arg7[%c0_18, %c0_19, %c0_20] : memref<1x32x128xf32, #tpu.memory_space<vmem>>, vector<1x32x128xf32>
        %39 = vector.shape_cast %38 : vector<1x32x128xf32> to vector<32x128xf32>
        %40 = vector.shape_cast %37 : vector<32x128xf32> to vector<1x32x128xf32>
        tpu.vector_store %arg7[%c0_18, %c0_19, %c0_20], %40 {strides = array<i32>} : memref<1x32x128xf32, #tpu.memory_space<vmem>>, vector<1x32x128xf32>,
      } else {
      }
    } else {
    }
    %7 = arith.index_cast %arg0 : i32 to index
    %8 = memref.load %arg2[%7] : memref<2xi32, #tpu.memory_space<smem>>
    %9 = arith.cmpi sge, %0, %8 : i32
    %10 = arith.extui %9 : i1 to i32
    %c0_i32_1 = arith.constant 0 : i32
    %11 = arith.cmpi ne, %10, %c0_i32_1 : i32
    scf.if %11 {
      %cst = arith.constant 0.000000e+00 : f32
      %12 = vector.broadcast %cst : f32 to vector<1x32x128xf32>
      %c0 = arith.constant 0 : index
      %c0_2 = arith.constant 0 : index
      %c0_3 = arith.constant 0 : index
      %13 = vector.load %arg7[%c0, %c0_2, %c0_3] : memref<1x32x128xf32, #tpu.memory_space<vmem>>, vector<1x32x128xf32>
      tpu.vector_store %arg7[%c0, %c0_2, %c0_3], %12 {strides = array<i32>} : memref<1x32x128xf32, #tpu.memory_space<vmem>>, vector<1x32x128xf32>,
    } else {
    }
    return
  }
  func.func @transform_0(%arg0: i32, %arg1: i32, %arg2: memref<2xi32, #tpu.memory_space<smem>>, %arg3: memref<2x1xi32, #tpu.memory_space<smem>>, %arg4: memref<2x1xi32, #tpu.memory_space<smem>>) -> (i32, i32, i32) {
    %c0_i32 = arith.constant 0 : i32
    %c0_i32_0 = arith.constant 0 : i32
    %c0_i32_1 = arith.constant 0 : i32
    return %arg0, %c0_i32, %c0_i32_0 : i32, i32, i32
  }
  func.func @transform_1(%arg0: i32, %arg1: i32, %arg2: memref<2xi32, #tpu.memory_space<smem>>, %arg3: memref<2x1xi32, #tpu.memory_space<smem>>, %arg4: memref<2x1xi32, #tpu.memory_space<smem>>) -> (i32, i32, i32) {
    %c0_i32 = arith.constant 0 : i32
    %c0_i32_0 = arith.constant 0 : i32
    return %arg0, %arg1, %c0_i32 : i32, i32, i32
  }
  func.func @transform_2(%arg0: i32, %arg1: i32, %arg2: memref<2xi32, #tpu.memory_space<smem>>, %arg3: memref<2x1xi32, #tpu.memory_space<smem>>, %arg4: memref<2x1xi32, #tpu.memory_space<smem>>) -> (i32, i32, i32) {
    %c0_i32 = arith.constant 0 : i32
    %c0_i32_0 = arith.constant 0 : i32
    return %arg0, %arg1, %c0_i32 : i32, i32, i32
  }
}

</mosaic_0001>

<llo_original>
// kernel: tpu_custom_call.1
$region0: #{tpu_custom_call.1}
  #allocation0 [shape = 'u32[]', space=smem, size = 0x4, offset = 0x4, fixed_abs, tag = 'smem constant byte address 0x4 - core index']
  #allocation1 [shape = 'u32[72,128]{1,0:T(1,128)}', space=vmem, size = 0x9000, scoped, tag = 'internal scratch']
  #allocation2 [shape = 's32[1]{0}', space=sflag, size = 0x4, scoped, tag = 'scoped memory for tpu_custom_call.1']
  #allocation3 [shape = 'u8[512]{0}', space=smem, size = 0x200, scoped, tag = 'prefetched SMEM operand 0']
  #allocation4 [shape = 'u8[1024]{0}', space=smem, size = 0x400, scoped, tag = 'prefetched SMEM operand 1']
  #allocation5 [shape = 'u8[1024]{0}', space=smem, size = 0x400, scoped, tag = 'prefetched SMEM operand 2']
  %s0 = inlined_call_operand.vmem [shape: s32[2], index: 0, kind: input, shape index: {}]
  %s1 = inlined_call_operand.vmem [shape: s32[2,1], index: 1, kind: input, shape index: {}]
  %s2 = inlined_call_operand.vmem [shape: s32[2,1], index: 2, kind: input, shape index: {}]
  %s3 = inlined_call_operand.vmem [shape: f32[2,8,128], index: 3, kind: input, shape index: {}]
  %s4 = inlined_call_operand.vmem [shape: s32[2,32,1], index: 4, kind: input, shape index: {}]
  %s5 = inlined_call_operand.hbm [shape: f32[2,32,128], index: 5, kind: output, shape index: {}]
  %s6 = sld [smem:[#allocation0]]
  $region53: #{tpu_custom_call.1} parent=0
    _
  %s8 = ssub.s32 1, %s6
  %s9 = scalar_select 0, %s8, %s6
  %s11 = sshll.u32 %s0, 4
  %s12 = int_to_ptr.vmem [resolvable:$true] %s11
  %14 = dma.vmem_to_smem %s12, 16, [#allocation3], [#allocation2]
  %s16 = sshll.u32 %s1, 4
  %s17 = int_to_ptr.vmem [resolvable:$true] %s16
  %19 = dma.vmem_to_smem %s17, 32, [#allocation4], [#allocation2]
  %s21 = sshll.u32 %s2, 4
  %s22 = int_to_ptr.vmem [resolvable:$true] %s21
  %24 = dma.vmem_to_smem %s22, 32, [#allocation5], [#allocation2]
  %26 = dma.done [#allocation2], 80
  %27 = sfence
  $region1: #{tpu_custom_call.1} parent=0
    #allocation6 [shape = 'u8[32768]{0}', space=vmem, size = 0x8000, scoped, tag = 'output window, operand 0']
    #allocation7 [shape = 's32[2]{0}', space=sflag, size = 0x8, scoped, tag = 'scoped memory for tpu_custom_call.1']
    %28 = vsyncpa [#allocation7], 0
    %s29 = scalar_lea.sflag [#allocation7], 1
    %30 = vsyncpa %s29, 0
    loop: start=0, step=1, limit=4
    $region2: #{tpu_custom_call.1} parent=1 // loop_pre_header
      _
    $region3: #{tpu_custom_call.1} parent=1 // loop_header
      %s32 = sphi 0, %s36
      %p33 = scmp.ge.s32.totalorder %s32, 4
      %s39 = sphi 0, %s51
      %s40 = sphi 0, %s47
      %s41 = sphi 0, %s39
      %s42 = sphi 0, %s40
      %s43 = sphi 0, %s41
      %s44 = sphi 0, %s42
      %s54 = sphi 0, %s56
      %s57 = sphi 0, %s54
      %s58 = sphi 0, %s57
      %s74 = sphi 0, %s58
      %s82 = sphi 0, %s84
      %s85 = sphi 0, %s82
      %s86 = sphi 0, %s85
      %s102 = sphi 0, %s86
      %s110 = sphi 0, %s112
      %s113 = sphi 0, %s110
      %s114 = sphi 0, %s113
      %s130 = sphi 0, %s114
    $region4: #{tpu_custom_call.1} parent=1 // loop_header_branch
      %35 = sbr.rel (%p33) target = $region8
    $region5: #{tpu_custom_call.1} parent=1 // loop_body
      %s37 = ssub.s32 %s32, 1
      %s38 = ssub.s32 %s32, 2
      %s45 = sadd.s32 1, %s40
      %p46 = scmp.ge.s32.totalorder %s45, 1
      %s47 = scalar_select %p46, 0, %s45
      %s48 = sadd.s32 1, %s39
      %s49 = scalar_select %p46, %s48, %s39
      %p50 = scmp.ge.s32.totalorder %s49, 2
      %s51 = scalar_select %p50, 0, %s49
      %s52 = ssub.s32 %s39, %s51
      %p53 = scmp.eq.s32.totalorder %s52, 0
      %s55 = sadd.s32 %s54, 1
      %s56 = scalar_select %p53, %s54, %s55
      %p59 = pneg %p53
      %p60 = scmp.eq.s32.totalorder %s32, 1
      %p61 = por %p59, %p60
      %p62 = scmp.ne.s32.totalorder %s54, %s57
      %p63 = scmp.eq.s32.totalorder %s32, 0
      %p64 = por %p62, %p63
      %p65 = scmp.ne.s32.totalorder %s54, %s57
      %p66 = scmp.eq.s32.totalorder %s37, 1
      %p67 = por %p65, %p66
      %p68 = scmp.ne.s32.totalorder %s57, %s58
      %p69 = scmp.eq.s32.totalorder %s37, 0
      %p70 = por %p68, %p69
      %p71 = scmp.ne.s32.totalorder %s57, %s58
      %p72 = scmp.eq.s32.totalorder %s38, 1
      %p73 = por %p71, %p72
      %p75 = scmp.ne.s32.totalorder %s58, %s74
      %p76 = scmp.eq.s32.totalorder %s38, 0
      %p77 = por %p75, %p76
      %s78 = ssub.s32 %s39, %s51
      %s79 = ssub.s32 %s40, %s47
      %s80 = sor.u32 %s78, %s79
      %p81 = scmp.eq.s32.totalorder %s80, 0
      %s83 = sadd.s32 %s82, 1
      %s84 = scalar_select %p81, %s82, %s83
      %p87 = pneg %p81
      %p88 = scmp.eq.s32.totalorder %s32, 1
      %p89 = por %p87, %p88
      %p90 = scmp.ne.s32.totalorder %s82, %s85
      %p91 = scmp.eq.s32.totalorder %s32, 0
      %p92 = por %p90, %p91
      %p93 = scmp.ne.s32.totalorder %s82, %s85
      %p94 = scmp.eq.s32.totalorder %s37, 1
      %p95 = por %p93, %p94
      %p96 = scmp.ne.s32.totalorder %s85, %s86
      %p97 = scmp.eq.s32.totalorder %s37, 0
      %p98 = por %p96, %p97
      %p99 = scmp.ne.s32.totalorder %s85, %s86
      %p100 = scmp.eq.s32.totalorder %s38, 1
      %p101 = por %p99, %p100
      %p103 = scmp.ne.s32.totalorder %s86, %s102
      %p104 = scmp.eq.s32.totalorder %s38, 0
      %p105 = por %p103, %p104
      %s106 = ssub.s32 %s39, %s51
      %s107 = ssub.s32 %s40, %s47
      %s108 = sor.u32 %s106, %s107
      %p109 = scmp.eq.s32.totalorder %s108, 0
      %s111 = sadd.s32 %s110, 1
      %s112 = scalar_select %p109, %s110, %s111
      %p115 = pneg %p109
      %p116 = scmp.eq.s32.totalorder %s32, 1
      %p117 = por %p115, %p116
      %p118 = scmp.ne.s32.totalorder %s110, %s113
      %p119 = scmp.eq.s32.totalorder %s32, 0
      %p120 = por %p118, %p119
      %p121 = scmp.ne.s32.totalorder %s110, %s113
      %p122 = scmp.eq.s32.totalorder %s37, 1
      %p123 = por %p121, %p122
      %p124 = scmp.ne.s32.totalorder %s113, %s114
      %p125 = scmp.eq.s32.totalorder %s37, 0
      %p126 = por %p124, %p125
      %p127 = scmp.ne.s32.totalorder %s113, %s114
      %p128 = scmp.eq.s32.totalorder %s38, 1
      %p129 = por %p127, %p128
      %p131 = scmp.ne.s32.totalorder %s114, %s130
      %p132 = scmp.eq.s32.totalorder %s38, 0
      %p133 = por %p131, %p132
      %p134 = scmp.le.s32.totalorder 1, %s32
      %p135 = scmp.lt.s32.totalorder %s32, 3
      %p136 = pnand %p134, %p135
      %p137 = pneg %p136
      // Predicated region
      $region9: #{tpu_custom_call.1} parent=5 // pred_check
        _
      $region10: #{tpu_custom_call.1} parent=5 // pred_check_branch
        %139 = sbr.rel (%p136) target = $region12
      $region11: #{tpu_custom_call.1} parent=5 // pred_region
        %s140 = ssub.s32 %s32, 1
      $region12: #{tpu_custom_call.1} parent=5 // pred_fallthru
        _
      %p141 = scmp.lt.s32.totalorder %s32, 2
      // Predicated region
      $region13: #{tpu_custom_call.1} parent=5 // pred_check
        %p142 = pneg %p141
      $region14: #{tpu_custom_call.1} parent=5 // pred_check_branch
        %144 = sbr.rel (%p142) target = $region16
      $region15: #{tpu_custom_call.1} parent=5 // pred_region
        // Predicated region
        $region17: #{tpu_custom_call.1} parent=15 // pred_check
          %p145 = pneg %p64
        $region18: #{tpu_custom_call.1} parent=15 // pred_check_branch
          %147 = sbr.rel (%p145) target = $region20
        $region19: #{tpu_custom_call.1} parent=15 // pred_region
          %p148 = scmp.lt.s32.totalorder %s39, 1
          %s149 = scalar_select %p148, %s39, 1
          %s150 = smul.addr %s149, 8
          %s151 = scalar_lea.vmem %s3, %s150
        $region20: #{tpu_custom_call.1} parent=15 // pred_fallthru
          _
        // Predicated region
        $region21: #{tpu_custom_call.1} parent=15 // pred_check
          %p152 = pneg %p92
        $region22: #{tpu_custom_call.1} parent=15 // pred_check_branch
          %154 = sbr.rel (%p152) target = $region24
        $region23: #{tpu_custom_call.1} parent=15 // pred_region
          %s155 = smul.u32 4, %s40
          %p156 = scmp.lt.s32.totalorder %s39, 1
          %s157 = scalar_select %p156, %s39, 1
          %p158 = scmp.lt.s32.totalorder %s155, 3
          %s159 = scalar_select %p158, %s155, 3
          %s160 = smul.addr %s157, 4
          %s161 = sadd.s32 %s159, %s160
          %s162 = smul.addr %s161, 8
          %s163 = scalar_lea.vmem %s4, %s162
          %s164 = smul.u32 4, %s40
        $region24: #{tpu_custom_call.1} parent=15 // pred_fallthru
          _
      $region16: #{tpu_custom_call.1} parent=5 // pred_fallthru
        _
      %p165 = scmp.le.s32.totalorder 1, %s32
      %p166 = scmp.lt.s32.totalorder %s32, 3
      %p167 = pnand %p165, %p166
      %p168 = pneg %p167
      // Predicated region
      $region25: #{tpu_custom_call.1} parent=5 // pred_check
        _
      $region26: #{tpu_custom_call.1} parent=5 // pred_check_branch
        %170 = sbr.rel (%p167) target = $region28
      $region27: #{tpu_custom_call.1} parent=5 // pred_region
        %s171 = ssub.s32 %s32, 1
        %p172 = scmp.lt.s32.totalorder %s41, 1
        %s173 = scalar_select %p172, %s41, 1
        %s174 = smul.addr %s173, 8
        %s175 = scalar_lea.vmem %s3, %s174
        %p176 = pneg %p70
        %p177 = pneg %p67
        %s178 = smul.u32 4, %s42
        %p179 = scmp.lt.s32.totalorder %s41, 1
        %s180 = scalar_select %p179, %s41, 1
        %p181 = scmp.lt.s32.totalorder %s178, 3
        %s182 = scalar_select %p181, %s178, 3
        %s183 = smul.addr %s180, 4
        %s184 = sadd.s32 %s182, %s183
        %s185 = smul.addr %s184, 8
        %s186 = scalar_lea.vmem %s4, %s185
        %p187 = pneg %p98
        %p188 = pneg %p95
        %p189 = pneg %p126
        %p190 = pneg %p123
        %s191 = sand.u32 %s113, 1
        %s192 = scalar_lea.sflag [#allocation7], %s191
        %s193 = sand.u32 %s113, 1
        %s194 = smul.addr %s193, 32
        %s195 = scalar_lea.vmem [#allocation6], %s194
        %p196 = scmp.lt.s32.totalorder %s41, 1
        %s197 = scalar_select %p196, %s41, 1
        %s198 = smul.addr %s197, 8
        %s199 = scalar_lea.vmem %s3, %s198
        %s200 = smul.u32 4, %s42
        %p201 = scmp.lt.s32.totalorder %s41, 1
        %s202 = scalar_select %p201, %s41, 1
        %p203 = scmp.lt.s32.totalorder %s200, 3
        %s204 = scalar_select %p203, %s200, 3
        %s205 = smul.addr %s202, 4
        %s206 = sadd.s32 %s204, %s205
        %s207 = smul.addr %s206, 8
        %s208 = scalar_lea.vmem %s4, %s207
        %s209 = smul.u32 4, %s42
        %s210 = smul.u32 4, %s42
        %s211 = smul.u32 %s42, 32
        %s212 = sadd.s32 %s211, 32
        %s213 = sld [smem:[#allocation3 + %s41]]
        %p214 = scmp.lt.s32.totalorder %s211, %s213
        // Predicated region
        $region29: #{tpu_custom_call.1} parent=27 // pred_check
          %p215 = pneg %p214
        $region30: #{tpu_custom_call.1} parent=27 // pred_check_branch
          %217 = sbr.rel (%p215) target = $region32
        $region31: #{tpu_custom_call.1} parent=27 // pred_region
          %218 = vst [vmem:[%s195] sm:$0xff] 0.0
          %219 = vst [vmem:[%s195 + $0x8] sm:$0xff] 0.0
          %220 = vst [vmem:[%s195 + $0x10] sm:$0xff] 0.0
          %221 = vst [vmem:[%s195 + $0x18] sm:$0xff] 0.0
          %v222 = vld [vmem:[%s208] sm:$0xff]
          %v223 = vld [vmem:[%s208 + $0x8] sm:$0xff]
          %v224 = vld [vmem:[%s208 + $0x10] sm:$0xff]
          %v225 = vld [vmem:[%s208 + $0x18] sm:$0xff]
          %s226 = smul.u32 %s41, 128
          %s227 = sld [smem:[#allocation5 + %s226]]
          %p228 = scmp.gt.s32.totalorder %s227, %s211
          %s229 = sld [smem:[#allocation4 + %s226]]
          %p230 = scmp.lt.s32.totalorder %s229, %s212
          %p231 = pnand %p228, %p230
          %p232 = pneg %p231
          // Predicated region
          $region33: #{tpu_custom_call.1} parent=31 // pred_check
            _
          $region34: #{tpu_custom_call.1} parent=31 // pred_check_branch
            %234 = sbr.rel (%p231) target = $region36
          $region35: #{tpu_custom_call.1} parent=31 // pred_region
            %v235 = vlaneseq
            %v236 = vand.u32 %v235, 127
            %237 = vset.pattern.permute.xlu0 0
            %238 = vperm.xlu0 %237, %v222
            %v239 = vpop.permute.xlu0 %238
            %240 = vset.pattern.permute.xlu0 0
            %241 = vperm.xlu0 %240, %v223
            %v242 = vpop.permute.xlu0 %241
            %243 = vset.pattern.permute.xlu0 0
            %244 = vperm.xlu0 %243, %v224
            %v245 = vpop.permute.xlu0 %244
            %246 = vset.pattern.permute.xlu0 0
            %247 = vperm.xlu0 %246, %v225
            %v248 = vpop.permute.xlu0 %247
            %vm249 = vcmp.eq.s32.totalorder %v239, %v236
            %vm250 = vcmp.eq.s32.totalorder %v242, %v236
            %vm251 = vcmp.eq.s32.totalorder %v245, %v236
            %vm252 = vcmp.eq.s32.totalorder %v248, %v236
            %v253 = vsel %vm249, 1, 0
            %v254 = vsel %vm250, 1, 0
            %v255 = vsel %vm251, 1, 0
            %v256 = vsel %vm252, 1, 0
            %v257 = vcvt.s32.f32 %v253
            %v258 = vcvt.s32.f32 %v254
            %v259 = vcvt.s32.f32 %v255
            %v260 = vcvt.s32.f32 %v256
            %v261 = vld [vmem:[%s199] sm:$0xff]
            %vm262 = vcmask 64512
            %v264 = vsel %vm262, %v257, 0
            %v267 = vsel %vm262, %v258, 0
            %v270 = vsel %vm262, %v259, 0
            %v273 = vsel %vm262, %v260, 0
            %275 = vmatpush.msra.mxu0 0.0
            %276 = vmatpush.msra.mxu0 0.0
            %277 = vmatpush.msra.mxu0 0.0
            %278 = vmatpush.msra.mxu0 0.0
            %279 = vmatpush.msra.mxu0 0.0
            %280 = vmatpush.msra.mxu0 0.0
            %281 = vmatpush.msra.mxu0 0.0
            %282 = vmatpush.msra.mxu0 0.0
            %283 = vmatpush.msra.mxu0 0.0
            %284 = vmatpush.msra.mxu0 0.0
            %285 = vmatpush.msra.mxu0 0.0
            %286 = vmatpush.msra.mxu0 0.0
            %287 = vmatpush.msra.mxu0 0.0
            %288 = vmatpush.msra.mxu0 0.0
            %289 = vmatpush.msra.mxu0 0.0
            %290 = vmatpush.msra.mxu0 %v261
            %291 = vmatmul.f32.gmra.mxu0 %v264
            %v292 = vpop.f32.mrf.mxu0
            %v293 = vadd.f32 0.0, %v292
            %294 = vmatmul.f32.gmra.mxu0 %v267
            %v295 = vpop.f32.mrf.mxu0
            %v296 = vadd.f32 0.0, %v295
            %297 = vmatmul.f32.gmra.mxu0 %v270
            %v298 = vpop.f32.mrf.mxu0
            %v299 = vadd.f32 0.0, %v298
            %300 = vmatmul.f32.gmra.mxu0 %v273
            %v301 = vpop.f32.mrf.mxu0
            %v302 = vadd.f32 0.0, %v301
            %303 = vdwg.mxu0
            %v304 = vld [vmem:[%s195] sm:$0xff]
            %v305 = vld [vmem:[%s195 + $0x8] sm:$0xff]
            %v306 = vld [vmem:[%s195 + $0x10] sm:$0xff]
            %v307 = vld [vmem:[%s195 + $0x18] sm:$0xff]
            %v308 = vadd.f32 %v304, %v293
            %v309 = vadd.f32 %v305, %v296
            %v310 = vadd.f32 %v306, %v299
            %v311 = vadd.f32 %v307, %v302
            %312 = vst [vmem:[%s195] sm:$0xff] %v308
            %313 = vst [vmem:[%s195 + $0x8] sm:$0xff] %v309
            %314 = vst [vmem:[%s195 + $0x10] sm:$0xff] %v310
            %315 = vst [vmem:[%s195 + $0x18] sm:$0xff] %v311
          $region36: #{tpu_custom_call.1} parent=31 // pred_fallthru
            _
        $region32: #{tpu_custom_call.1} parent=27 // pred_fallthru
          _
        %s316 = sld [smem:[#allocation3 + %s41]]
        %p317 = scmp.ge.s32.totalorder %s211, %s316
        // Predicated region
        $region37: #{tpu_custom_call.1} parent=27 // pred_check
          %p318 = pneg %p317
        $region38: #{tpu_custom_call.1} parent=27 // pred_check_branch
          %320 = sbr.rel (%p318) target = $region40
        $region39: #{tpu_custom_call.1} parent=27 // pred_region
          %321 = vst [vmem:[%s195] sm:$0xff] 0.0
          %322 = vst [vmem:[%s195 + $0x8] sm:$0xff] 0.0
          %323 = vst [vmem:[%s195 + $0x10] sm:$0xff] 0.0
          %324 = vst [vmem:[%s195 + $0x18] sm:$0xff] 0.0
        $region40: #{tpu_custom_call.1} parent=27 // pred_fallthru
          _
        %s325 = sand.u32 %s113, 1
        %s326 = scalar_lea.sflag [#allocation7], %s325
        %s327 = sand.u32 %s113, 1
        %s328 = smul.addr %s327, 32
        %s329 = scalar_lea.vmem [#allocation6], %s328
        // Predicated region
        $region41: #{tpu_custom_call.1} parent=27 // pred_check
          %p330 = pneg %p123
        $region42: #{tpu_custom_call.1} parent=27 // pred_check_branch
          %332 = sbr.rel (%p330) target = $region44
        $region43: #{tpu_custom_call.1} parent=27 // pred_region
          %s333 = smul.u32 4, %s42
          %335 = vsyncadd %s326, 0
          %s336 = smul.addr %s41, 4
          %s337 = sadd.s32 %s333, %s336
          %s338 = smul.addr %s337, 8
          %s339 = scalar_lea.hbm %s5, %s338
          %s340 = sshll.u32 %s329, 4
          %s341 = int_to_ptr.vmem [resolvable:$true] %s340
          %s342 = sshll.u32 %s339, 4
          %s343 = int_to_ptr.hbm [resolvable:$true] %s342
          %348 = dma.vmem_to_hbm [thread:$0]  %s341, 512, %s343, %s326, 128, 128, 8
        $region44: #{tpu_custom_call.1} parent=27 // pred_fallthru
          _
      $region28: #{tpu_custom_call.1} parent=5 // pred_fallthru
        _
      %p349 = scmp.le.s32.totalorder 2, %s32
      // Predicated region
      $region45: #{tpu_custom_call.1} parent=5 // pred_check
        %p350 = pneg %p349
      $region46: #{tpu_custom_call.1} parent=5 // pred_check_branch
        %352 = sbr.rel (%p350) target = $region48
      $region47: #{tpu_custom_call.1} parent=5 // pred_region
        %s353 = ssub.s32 %s32, 2
        // Predicated region
        $region49: #{tpu_custom_call.1} parent=47 // pred_check
          %p354 = pneg %p129
        $region50: #{tpu_custom_call.1} parent=47 // pred_check_branch
          %356 = sbr.rel (%p354) target = $region52
        $region51: #{tpu_custom_call.1} parent=47 // pred_region
          %s357 = sand.u32 %s114, 1
          %s358 = scalar_lea.sflag [#allocation7], %s357
          %s359 = sand.u32 %s114, 1
          %s360 = smul.addr %s359, 32
          %s361 = scalar_lea.vmem [#allocation6], %s360
          %363 = dma.done %s358, 512
        $region52: #{tpu_custom_call.1} parent=47 // pred_fallthru
          _
      $region48: #{tpu_custom_call.1} parent=5 // pred_fallthru
        _
    $region6: #{tpu_custom_call.1} parent=1 // loop_footer
      %s36 = sadd.s32 1, %s32
    $region7: #{tpu_custom_call.1} parent=1 // loop_footer_branch
      %31 = sbr.rel target = $region3
    $region8: #{tpu_custom_call.1} parent=1 // loop_exit
      _
    %364 = vsyncpa [#allocation7], 1
    %s365 = scalar_lea.sflag [#allocation7], 1
    %366 = vsyncpa %s365, 1

</llo_original>
